<compile_context>
chip_gen: v7x
topology: tpu7x:2x2x1
jax: 0.10.0
libtpu: 0.0.40
codegen_flags: <defaults>
</compile_context>

<pallas_src>
import jax
import jax.numpy as jnp
from jax.experimental import pallas as pl
from jax.experimental.pallas import tpu as pltpu


def _round_up(n, m):
    return ((n + m - 1) // m) * m


def wav2vec_classifier_forward(x, conv_w, conv_b, cls_w, cls_b,
                               *, kernel_size=10, stride=5,
                               batch_tile=8, time_tile=16):
    """x: (B, Cin, L) f32. conv_w: (512, Cin, K). cls_w: (num_classes, 512)."""
    B, Cin, L = x.shape
    out_ch = conv_w.shape[0]
    num_classes = cls_w.shape[0]
    T = (L - kernel_size) // stride + 1
    ck = Cin * kernel_size

    # Padded sizes: ck only to the bf16 sublane pack (16), classes to 128 lanes.
    ckp = _round_up(ck, 16)
    cp = _round_up(num_classes, 128)
    TB = batch_tile
    TT = min(time_tile, _round_up(T, 8))
    B_pad = _round_up(B, TB)
    T_pad = _round_up(T, TT)
    inv_t = 1.0 / T

    # --- JAX glue: strided-slice im2col (no gather), pads, bf16 cast ----------
    # cols[k] = x[:, :, k : k + stride*(T-1)+1 : stride]  -> (B, Cin, T)
    cols = [x[:, :, k:k + stride * (T - 1) + 1:stride] for k in range(kernel_size)]
    patches = jnp.stack(cols, axis=2)                       # (B, Cin, K, T)
    patches = patches.transpose(0, 3, 1, 2).reshape(B, T, ck)  # (B, T, Cin*K)
    patches = jnp.pad(patches, ((0, B_pad - B), (0, T_pad - T), (0, ckp - ck)))
    patches = patches.astype(jnp.bfloat16)                  # (B_pad, T_pad, ckp)

    # Weights stay f32 (tiny); matmuls run with f32 accumulation.
    convw2 = jnp.pad(conv_w.reshape(out_ch, ck).T.astype(jnp.float32),
                     ((0, ckp - ck), (0, 0)))               # (ckp, 512)
    convb2 = conv_b.reshape(1, out_ch).astype(jnp.float32)  # (1, 512)
    clsw2 = jnp.pad(cls_w.T.astype(jnp.float32),
                    ((0, 0), (0, cp - num_classes)))        # (512, cp)
    clsb2 = jnp.pad(cls_b.reshape(1, num_classes).astype(jnp.float32),
                    ((0, 0), (0, cp - num_classes)))        # (1, cp)

    def kernel(patches_ref, convw_ref, convb_ref, clsw_ref, clsb_ref,
               out_ref, acc_ref):
        # patches_ref: (TB, TT, ckp) bf16   acc_ref: (TB, ckp) f32 running sum
        t_idx = pl.program_id(1)

        @pl.when(t_idx == 0)
        def _init():
            acc_ref[...] = jnp.zeros_like(acc_ref)

        # VPU accumulate: running time-sum of the im2col patches (zero-padded
        # time rows contribute nothing).
        acc_ref[...] += jnp.sum(patches_ref[...].astype(jnp.float32), axis=1)

        @pl.when(t_idx == pl.num_programs(1) - 1)
        def _finalize():
            pooled_p = acc_ref[...] * inv_t                          # (TB, ckp) f32
            # "base" encoder on the time-pooled patches (== mean_t of conv
            # output by linearity); bias hoisted out of the per-step add.
            c_pooled = jnp.dot(pooled_p, convw_ref[...],
                               preferred_element_type=jnp.float32) + convb_ref[...]
            # classifier: Linear(512, num_classes), lane-dense padded output.
            logits = jnp.dot(c_pooled, clsw_ref[...],
                             preferred_element_type=jnp.float32) + clsb_ref[...]
            out_ref[...] = logits.astype(out_ref.dtype)              # (TB, cp)

    out = pl.pallas_call(
        kernel,
        out_shape=jax.ShapeDtypeStruct((B_pad, cp), jnp.float32),
        grid=(B_pad // TB, T_pad // TT),
        in_specs=[
            pl.BlockSpec((TB, TT, ckp), lambda i, t: (i, t, 0)),
            pl.BlockSpec((ckp, out_ch), lambda i, t: (0, 0)),
            pl.BlockSpec((1, out_ch), lambda i, t: (0, 0)),
            pl.BlockSpec((out_ch, cp), lambda i, t: (0, 0)),
            pl.BlockSpec((1, cp), lambda i, t: (0, 0)),
        ],
        out_specs=pl.BlockSpec((TB, cp), lambda i, t: (i, 0)),
        scratch_shapes=[pltpu.VMEM((TB, ckp), jnp.float32)],
        compiler_params=pltpu.CompilerParams(
            dimension_semantics=("parallel", "arbitrary")),
    )(patches, convw2, convb2, clsw2, clsb2)
    return out[:B, :num_classes]                                     # (B, num_classes)


def _reference_forward(x, conv_w, conv_b, cls_w, cls_b,
                       *, kernel_size=10, stride=5):
    """Pure-JAX f32 reference mirroring the PyTorch module."""
    c = jax.lax.conv_general_dilated(
        x, conv_w, window_strides=(stride,), padding="VALID",
        dimension_numbers=("NCH", "OIH", "NCH")) + conv_b[None, :, None]  # (B, 512, T)
    pooled = c.mean(axis=2)                                               # (B, 512)
    return pooled @ cls_w.T + cls_b


if __name__ == "__main__":
    B, Cin, L = 2, 1, 165          # raw audio: batch=2, mono, 165 samples -> T=32
    OUT_CH, K, STRIDE = 512, 10, 5
    NUM_CLASSES = 10

    key = jax.random.PRNGKey(0)
    k1, k2, k3, k4, k5 = jax.random.split(key, 5)
    x = jax.random.normal(k1, (B, Cin, L), jnp.float32)
    conv_w = jax.random.normal(k2, (OUT_CH, Cin, K), jnp.float32) * 0.05
    conv_b = jax.random.normal(k3, (OUT_CH,), jnp.float32) * 0.05
    cls_w = jax.random.normal(k4, (NUM_CLASSES, OUT_CH), jnp.float32) * 0.05
    cls_b = jax.random.normal(k5, (NUM_CLASSES,), jnp.float32) * 0.05

    out = jax.block_until_ready(
        wav2vec_classifier_forward(x, conv_w, conv_b, cls_w, cls_b,
                                   kernel_size=K, stride=STRIDE))
    assert out.shape == (B, NUM_CLASSES), out.shape

    ref = _reference_forward(x, conv_w, conv_b, cls_w, cls_b,
                             kernel_size=K, stride=STRIDE)
    assert jnp.allclose(out, ref, rtol=2e-2, atol=2e-2), (out, ref)

    print("KERNEL_OK")
</pallas_src>

<mosaic_0001>
module attributes {stable_mosaic.version = 11 : i64} {
  func.func @kernel(%arg0: i32, %arg1: i32, %arg2: memref<8x16x16xbf16, #tpu.memory_space<vmem>>, %arg3: memref<16x512xf32, #tpu.memory_space<vmem>>, %arg4: memref<1x512xf32, #tpu.memory_space<vmem>>, %arg5: memref<512x128xf32, #tpu.memory_space<vmem>>, %arg6: memref<1x128xf32, #tpu.memory_space<vmem>>, %arg7: memref<8x128xf32, #tpu.memory_space<vmem>>, %arg8: memref<8x16xf32, #tpu.memory_space<vmem>>) attributes {dimension_semantics = [#tpu.dimension_semantics<parallel>, #tpu.dimension_semantics<arbitrary>], iteration_bounds = array<i64: 1, 2>, scalar_prefetch = 0 : i64, scratch_operands = 1 : i64, tpu.core_type = #tpu.core_type<tc>, window_params = [{transform_indices = @transform_0, window_bounds = array<i64: 8, 16, 16>}, {pipeline_mode = #tpu.pipeline_mode<synchronous>, transform_indices = @transform_1, window_bounds = array<i64: 16, 512>}, {pipeline_mode = #tpu.pipeline_mode<synchronous>, transform_indices = @transform_2, window_bounds = array<i64: 1, 512>}, {pipeline_mode = #tpu.pipeline_mode<synchronous>, transform_indices = @transform_3, window_bounds = array<i64: 512, 128>}, {pipeline_mode = #tpu.pipeline_mode<synchronous>, transform_indices = @transform_4, window_bounds = array<i64: 1, 128>}, {transform_indices = @transform_5, window_bounds = array<i64: 8, 128>}]} {
    %c0_i32 = arith.constant 0 : i32
    %0 = arith.cmpi eq, %arg1, %c0_i32 : i32
    %1 = arith.extui %0 : i1 to i32
    %c0_i32_0 = arith.constant 0 : i32
    %2 = arith.cmpi ne, %1, %c0_i32_0 : i32
    scf.if %2 {
      %cst_8 = arith.constant 0.000000e+00 : f32
      %12 = vector.broadcast %cst_8 : f32 to vector<8x16xf32>
      %c0_9 = arith.constant 0 : index
      %c0_10 = arith.constant 0 : index
      %13 = vector.load %arg8[%c0_9, %c0_10] : memref<8x16xf32, #tpu.memory_space<vmem>>, vector<8x16xf32>
      tpu.vector_store %arg8[%c0_9, %c0_10], %12 {strides = array<i32>} : memref<8x16xf32, #tpu.memory_space<vmem>>, vector<8x16xf32>,
    } else {
    }
    %c0 = arith.constant 0 : index
    %c0_1 = arith.constant 0 : index
    %3 = vector.load %arg8[%c0, %c0_1] : memref<8x16xf32, #tpu.memory_space<vmem>>, vector<8x16xf32>
    %c0_2 = arith.constant 0 : index
    %c0_3 = arith.constant 0 : index
    %c0_4 = arith.constant 0 : index
    %4 = vector.load %arg2[%c0_2, %c0_3, %c0_4] : memref<8x16x16xbf16, #tpu.memory_space<vmem>>, vector<8x16x16xbf16>
    %5 = arith.extf %4 : vector<8x16x16xbf16> to vector<8x16x16xf32>
    %cst = arith.constant dense<0.000000e+00> : vector<8x16xf32>
    %6 = vector.multi_reduction <add>, %5, %cst [1] : vector<8x16x16xf32> to vector<8x16xf32>
    %7 = arith.addf %3, %6 : vector<8x16xf32>
    %c0_5 = arith.constant 0 : index
    %c0_6 = arith.constant 0 : index
    %8 = vector.load %arg8[%c0_5, %c0_6] : memref<8x16xf32, #tpu.memory_space<vmem>>, vector<8x16xf32>
    tpu.vector_store %arg8[%c0_5, %c0_6], %7 {strides = array<i32>} : memref<8x16xf32, #tpu.memory_space<vmem>>, vector<8x16xf32>,
    %c1_i32 = arith.constant 1 : i32
    %9 = arith.cmpi eq, %arg1, %c1_i32 : i32
    %10 = arith.extui %9 : i1 to i32
    %c0_i32_7 = arith.constant 0 : i32
    %11 = arith.cmpi ne, %10, %c0_i32_7 : i32
    scf.if %11 {
      %c0_8 = arith.constant 0 : index
      %c0_9 = arith.constant 0 : index
      %12 = vector.load %arg8[%c0_8, %c0_9] : memref<8x16xf32, #tpu.memory_space<vmem>>, vector<8x16xf32>
      %cst_10 = arith.constant 3.125000e-02 : f32
      %13 = vector.broadcast %cst_10 : f32 to vector<8x16xf32>
      %14 = arith.mulf %12, %13 : vector<8x16xf32>
      %c0_11 = arith.constant 0 : index
      %c0_12 = arith.constant 0 : index
      %15 = vector.load %arg3[%c0_11, %c0_12] : memref<16x512xf32, #tpu.memory_space<vmem>>, vector<16x512xf32>
      %cst_13 = arith.constant dense<0.000000e+00> : vector<8x512xf32>
      %16 = tpu.matmul %14, %15, %cst_13 {dimension_numbers = #tpu.dot_dimension_numbers<[1], [0], [0], [1], [0, 0, 1, 1], [], []>} : vector<8x16xf32>, vector<16x512xf32>, vector<8x512xf32> -> vector<8x512xf32>
      %c0_14 = arith.constant 0 : index
      %c0_15 = arith.constant 0 : index
      %17 = vector.load %arg4[%c0_14, %c0_15] : memref<1x512xf32, #tpu.memory_space<vmem>>, vector<1x512xf32>
      %18 = vector.broadcast %17 : vector<1x512xf32> to vector<8x512xf32>
      %19 = arith.addf %16, %18 : vector<8x512xf32>
      %c0_16 = arith.constant 0 : index
      %c0_17 = arith.constant 0 : index
      %20 = vector.load %arg5[%c0_16, %c0_17] : memref<512x128xf32, #tpu.memory_space<vmem>>, vector<512x128xf32>
      %cst_18 = arith.constant dense<0.000000e+00> : vector<8x128xf32>
      %21 = tpu.matmul %19, %20, %cst_18 {dimension_numbers = #tpu.dot_dimension_numbers<[1], [0], [0], [1], [0, 0, 1, 1], [], []>} : vector<8x512xf32>, vector<512x128xf32>, vector<8x128xf32> -> vector<8x128xf32>
      %c0_19 = arith.constant 0 : index
      %c0_20 = arith.constant 0 : index
      %22 = vector.load %arg6[%c0_19, %c0_20] : memref<1x128xf32, #tpu.memory_space<vmem>>, vector<1x128xf32>
      %23 = vector.broadcast %22 : vector<1x128xf32> to vector<8x128xf32>
      %24 = arith.addf %21, %23 : vector<8x128xf32>
      %c0_21 = arith.constant 0 : index
      %c0_22 = arith.constant 0 : index
      %25 = vector.load %arg7[%c0_21, %c0_22] : memref<8x128xf32, #tpu.memory_space<vmem>>, vector<8x128xf32>
      tpu.vector_store %arg7[%c0_21, %c0_22], %24 {strides = array<i32>} : memref<8x128xf32, #tpu.memory_space<vmem>>, vector<8x128xf32>,
    } else {
    }
    return
  }
  func.func @transform_0(%arg0: i32, %arg1: i32) -> (i32, i32, i32) {
    %c0_i32 = arith.constant 0 : i32
    %c0_i32_0 = arith.constant 0 : i32
    return %arg0, %arg1, %c0_i32 : i32, i32, i32
  }
  func.func @transform_1(%arg0: i32, %arg1: i32) -> (i32, i32) {
    %c0_i32 = arith.constant 0 : i32
    %c0_i32_0 = arith.constant 0 : i32
    %c0_i32_1 = arith.constant 0 : i32
    return %c0_i32, %c0_i32_0 : i32, i32
  }
  func.func @transform_2(%arg0: i32, %arg1: i32) -> (i32, i32) {
    %c0_i32 = arith.constant 0 : i32
    %c0_i32_0 = arith.constant 0 : i32
    %c0_i32_1 = arith.constant 0 : i32
    return %c0_i32, %c0_i32_0 : i32, i32
  }
  func.func @transform_3(%arg0: i32, %arg1: i32) -> (i32, i32) {
    %c0_i32 = arith.constant 0 : i32
    %c0_i32_0 = arith.constant 0 : i32
    %c0_i32_1 = arith.constant 0 : i32
    return %c0_i32, %c0_i32_0 : i32, i32
  }
  func.func @transform_4(%arg0: i32, %arg1: i32) -> (i32, i32) {
    %c0_i32 = arith.constant 0 : i32
    %c0_i32_0 = arith.constant 0 : i32
    %c0_i32_1 = arith.constant 0 : i32
    return %c0_i32, %c0_i32_0 : i32, i32
  }
  func.func @transform_5(%arg0: i32, %arg1: i32) -> (i32, i32) {
    %c0_i32 = arith.constant 0 : i32
    %c0_i32_0 = arith.constant 0 : i32
    return %arg0, %c0_i32 : i32, i32
  }
}

</mosaic_0001>

<llo_original>
// kernel: tpu_custom_call.1
$region0: #{tpu_custom_call.1}
  #allocation0 [shape = 'u32[]', space=smem, size = 0x4, offset = 0x4, fixed_abs, tag = 'smem constant byte address 0x4 - core index']
  #allocation1 [shape = 'u32[144,128]{1,0:T(1,128)}', space=vmem, size = 0x12000, scoped, tag = 'internal scratch']
  #allocation2 [shape = 'f32[8,16]{1,0:T(8,128)}', space=vmem, size = 0x1000, scoped, tag = 'scratch operand']
  %s0 = inlined_call_operand.vmem [shape: bf16[8,32,16], index: 0, kind: input, shape index: {}]
  %s1 = inlined_call_operand.vmem [shape: f32[16,512], index: 1, kind: input, shape index: {}]
  %s2 = inlined_call_operand.vmem [shape: f32[1,512], index: 2, kind: input, shape index: {}]
  %s3 = inlined_call_operand.hbm [shape: f32[512,128], index: 3, kind: input, shape index: {}]
  %s4 = inlined_call_operand.vmem [shape: f32[1,128], index: 4, kind: input, shape index: {}]
  %s5 = inlined_call_operand.hbm [shape: f32[8,128], index: 5, kind: output, shape index: {}]
  %s6 = sld [smem:[#allocation0]]
  $region106: #{tpu_custom_call.1} parent=0
    _
  %s8 = ssub.s32 1, %s6
  %s9 = scalar_select 0, %s8, %s6
  $region1: #{tpu_custom_call.1} parent=0
    #allocation3 [shape = 'u8[65536]{0}', space=vmem, size = 0x10000, scoped, tag = 'input window, operand 0']
    #allocation4 [shape = 'u8[262144]{0}', space=vmem, size = 0x40000, scoped, tag = 'input window, operand 3, single buffered']
    #allocation5 [shape = 's32[2]{0}', space=sflag, size = 0x8, scoped, tag = 'scoped memory for tpu_custom_call.1']
    #allocation6 [shape = 's32[2]{0}', space=sflag, size = 0x8, scoped, tag = 'scoped memory for tpu_custom_call.1']
    #allocation7 [shape = 'u8[4096]{0}', space=vmem, size = 0x1000, scoped, tag = 'output window, operand 0, single buffered']
    %10 = vsyncpa [#allocation5], 0
    %11 = vsyncpa [#allocation6], 0
    loop: start=0, step=1, limit=4
    $region2: #{tpu_custom_call.1} parent=1 // loop_pre_header
      _
    $region3: #{tpu_custom_call.1} parent=1 // loop_header
      %s13 = sphi 0, %s17
      %p14 = scmp.ge.s32.totalorder %s13, 4
      %s20 = sphi 0, %s32
      %s21 = sphi 0, %s28
      %s22 = sphi 0, %s20
      %s23 = sphi 0, %s21
      %s24 = sphi 0, %s22
      %s25 = sphi 0, %s23
      %s37 = sphi 0, %s39
      %s40 = sphi 0, %s37
      %s41 = sphi 0, %s40
      %s57 = sphi 0, %s41
      %s61 = sphi 0, %s61
      %s63 = sphi 0, %s61
      %s64 = sphi 0, %s63
      %s78 = sphi 0, %s64
      %s82 = sphi 0, %s82
      %s84 = sphi 0, %s82
      %s85 = sphi 0, %s84
      %s99 = sphi 0, %s85
      %s103 = sphi 0, %s103
      %s105 = sphi 0, %s103
      %s106 = sphi 0, %s105
      %s120 = sphi 0, %s106
      %s124 = sphi 0, %s124
      %s126 = sphi 0, %s124
      %s127 = sphi 0, %s126
      %s141 = sphi 0, %s127
      %s147 = sphi 0, %s149
      %s150 = sphi 0, %s147
      %s151 = sphi 0, %s150
      %s167 = sphi 0, %s151
    $region4: #{tpu_custom_call.1} parent=1 // loop_header_branch
      %16 = sbr.rel (%p14) target = $region8
    $region5: #{tpu_custom_call.1} parent=1 // loop_body
      %s18 = ssub.s32 %s13, 1
      %s19 = ssub.s32 %s13, 2
      %s26 = sadd.s32 1, %s21
      %p27 = scmp.ge.s32.totalorder %s26, 2
      %s28 = scalar_select %p27, 0, %s26
      %s29 = sadd.s32 1, %s20
      %s30 = scalar_select %p27, %s29, %s20
      %p31 = scmp.ge.s32.totalorder %s30, 1
      %s32 = scalar_select %p31, 0, %s30
      %s33 = ssub.s32 %s20, %s32
      %s34 = ssub.s32 %s21, %s28
      %s35 = sor.u32 %s33, %s34
      %p36 = scmp.eq.s32.totalorder %s35, 0
      %s38 = sadd.s32 %s37, 1
      %s39 = scalar_select %p36, %s37, %s38
      %p42 = pneg %p36
      %p43 = scmp.eq.s32.totalorder %s13, 1
      %p44 = por %p42, %p43
      %p45 = scmp.ne.s32.totalorder %s37, %s40
      %p46 = scmp.eq.s32.totalorder %s13, 0
      %p47 = por %p45, %p46
      %p48 = scmp.ne.s32.totalorder %s37, %s40
      %p49 = scmp.eq.s32.totalorder %s18, 1
      %p50 = por %p48, %p49
      %p51 = scmp.ne.s32.totalorder %s40, %s41
      %p52 = scmp.eq.s32.totalorder %s18, 0
      %p53 = por %p51, %p52
      %p54 = scmp.ne.s32.totalorder %s40, %s41
      %p55 = scmp.eq.s32.totalorder %s19, 1
      %p56 = por %p54, %p55
      %p58 = scmp.ne.s32.totalorder %s41, %s57
      %p59 = scmp.eq.s32.totalorder %s19, 0
      %p60 = por %p58, %p59
      %s62 = sadd.s32 %s61, 1
      %p65 = scmp.eq.s32.totalorder %s13, 1
      %p66 = scmp.ne.s32.totalorder %s61, %s63
      %p67 = scmp.eq.s32.totalorder %s13, 0
      %p68 = por %p66, %p67
      %p69 = scmp.ne.s32.totalorder %s61, %s63
      %p70 = scmp.eq.s32.totalorder %s18, 1
      %p71 = por %p69, %p70
      %p72 = scmp.ne.s32.totalorder %s63, %s64
      %p73 = scmp.eq.s32.totalorder %s18, 0
      %p74 = por %p72, %p73
      %p75 = scmp.ne.s32.totalorder %s63, %s64
      %p76 = scmp.eq.s32.totalorder %s19, 1
      %p77 = por %p75, %p76
      %p79 = scmp.ne.s32.totalorder %s64, %s78
      %p80 = scmp.eq.s32.totalorder %s19, 0
      %p81 = por %p79, %p80
      %s83 = sadd.s32 %s82, 1
      %p86 = scmp.eq.s32.totalorder %s13, 1
      %p87 = scmp.ne.s32.totalorder %s82, %s84
      %p88 = scmp.eq.s32.totalorder %s13, 0
      %p89 = por %p87, %p88
      %p90 = scmp.ne.s32.totalorder %s82, %s84
      %p91 = scmp.eq.s32.totalorder %s18, 1
      %p92 = por %p90, %p91
      %p93 = scmp.ne.s32.totalorder %s84, %s85
      %p94 = scmp.eq.s32.totalorder %s18, 0
      %p95 = por %p93, %p94
      %p96 = scmp.ne.s32.totalorder %s84, %s85
      %p97 = scmp.eq.s32.totalorder %s19, 1
      %p98 = por %p96, %p97
      %p100 = scmp.ne.s32.totalorder %s85, %s99
      %p101 = scmp.eq.s32.totalorder %s19, 0
      %p102 = por %p100, %p101
      %s104 = sadd.s32 %s103, 1
      %p107 = scmp.eq.s32.totalorder %s13, 1
      %p108 = scmp.ne.s32.totalorder %s103, %s105
      %p109 = scmp.eq.s32.totalorder %s13, 0
      %p110 = por %p108, %p109
      %p111 = scmp.ne.s32.totalorder %s103, %s105
      %p112 = scmp.eq.s32.totalorder %s18, 1
      %p113 = por %p111, %p112
      %p114 = scmp.ne.s32.totalorder %s105, %s106
      %p115 = scmp.eq.s32.totalorder %s18, 0
      %p116 = por %p114, %p115
      %p117 = scmp.ne.s32.totalorder %s105, %s106
      %p118 = scmp.eq.s32.totalorder %s19, 1
      %p119 = por %p117, %p118
      %p121 = scmp.ne.s32.totalorder %s106, %s120
      %p122 = scmp.eq.s32.totalorder %s19, 0
      %p123 = por %p121, %p122
      %s125 = sadd.s32 %s124, 1
      %p128 = scmp.eq.s32.totalorder %s13, 1
      %p129 = scmp.ne.s32.totalorder %s124, %s126
      %p130 = scmp.eq.s32.totalorder %s13, 0
      %p131 = por %p129, %p130
      %p132 = scmp.ne.s32.totalorder %s124, %s126
      %p133 = scmp.eq.s32.totalorder %s18, 1
      %p134 = por %p132, %p133
      %p135 = scmp.ne.s32.totalorder %s126, %s127
      %p136 = scmp.eq.s32.totalorder %s18, 0
      %p137 = por %p135, %p136
      %p138 = scmp.ne.s32.totalorder %s126, %s127
      %p139 = scmp.eq.s32.totalorder %s19, 1
      %p140 = por %p138, %p139
      %p142 = scmp.ne.s32.totalorder %s127, %s141
      %p143 = scmp.eq.s32.totalorder %s19, 0
      %p144 = por %p142, %p143
      %s145 = ssub.s32 %s20, %s32
      %p146 = scmp.eq.s32.totalorder %s145, 0
      %s148 = sadd.s32 %s147, 1
      %s149 = scalar_select %p146, %s147, %s148
      %p152 = pneg %p146
      %p153 = scmp.eq.s32.totalorder %s13, 1
      %p154 = por %p152, %p153
      %p155 = scmp.ne.s32.totalorder %s147, %s150
      %p156 = scmp.eq.s32.totalorder %s13, 0
      %p157 = por %p155, %p156
      %p158 = scmp.ne.s32.totalorder %s147, %s150
      %p159 = scmp.eq.s32.totalorder %s18, 1
      %p160 = por %p158, %p159
      %p161 = scmp.ne.s32.totalorder %s150, %s151
      %p162 = scmp.eq.s32.totalorder %s18, 0
      %p163 = por %p161, %p162
      %p164 = scmp.ne.s32.totalorder %s150, %s151
      %p165 = scmp.eq.s32.totalorder %s19, 1
      %p166 = por %p164, %p165
      %p168 = scmp.ne.s32.totalorder %s151, %s167
      %p169 = scmp.eq.s32.totalorder %s19, 0
      %p170 = por %p168, %p169
      %p171 = scmp.le.s32.totalorder 1, %s13
      %p172 = scmp.lt.s32.totalorder %s13, 3
      %p173 = pnand %p171, %p172
      %p174 = pneg %p173
      // Predicated region
      $region9: #{tpu_custom_call.1} parent=5 // pred_check
        _
      $region10: #{tpu_custom_call.1} parent=5 // pred_check_branch
        %176 = sbr.rel (%p173) target = $region12
      $region11: #{tpu_custom_call.1} parent=5 // pred_region
        %s177 = ssub.s32 %s13, 1
        // Predicated region
        $region13: #{tpu_custom_call.1} parent=11 // pred_check
          %p178 = pneg %p74
        $region14: #{tpu_custom_call.1} parent=11 // pred_check_branch
          %180 = sbr.rel (%p178) target = $region16
        $region15: #{tpu_custom_call.1} parent=11 // pred_region
          _
        $region16: #{tpu_custom_call.1} parent=11 // pred_fallthru
          _
        // Predicated region
        $region17: #{tpu_custom_call.1} parent=11 // pred_check
          %p181 = pneg %p95
        $region18: #{tpu_custom_call.1} parent=11 // pred_check_branch
          %183 = sbr.rel (%p181) target = $region20
        $region19: #{tpu_custom_call.1} parent=11 // pred_region
          _
        $region20: #{tpu_custom_call.1} parent=11 // pred_fallthru
          _
        // Predicated region
        $region21: #{tpu_custom_call.1} parent=11 // pred_check
          %p184 = pneg %p116
        $region22: #{tpu_custom_call.1} parent=11 // pred_check_branch
          %186 = sbr.rel (%p184) target = $region24
        $region23: #{tpu_custom_call.1} parent=11 // pred_region
          %s188 = ssub.s32 8192, 8192
          %189 = vsyncadd [#allocation5], %s188
          %s190 = sshll.u32 [#allocation4], 4
          %s191 = int_to_ptr.vmem [resolvable:$true] %s190
          %196 = dma.hbm_to_vmem [thread:$0]  %s3, 8192, %s191, [#allocation5], 128, 128, 8
        $region24: #{tpu_custom_call.1} parent=11 // pred_fallthru
          _
        // Predicated region
        $region25: #{tpu_custom_call.1} parent=11 // pred_check
          %p197 = pneg %p137
        $region26: #{tpu_custom_call.1} parent=11 // pred_check_branch
          %199 = sbr.rel (%p197) target = $region28
        $region27: #{tpu_custom_call.1} parent=11 // pred_region
          _
        $region28: #{tpu_custom_call.1} parent=11 // pred_fallthru
          _
      $region12: #{tpu_custom_call.1} parent=5 // pred_fallthru
        _
      %p200 = scmp.lt.s32.totalorder %s13, 2
      // Predicated region
      $region29: #{tpu_custom_call.1} parent=5 // pred_check
        %p201 = pneg %p200
      $region30: #{tpu_custom_call.1} parent=5 // pred_check_branch
        %203 = sbr.rel (%p201) target = $region32
      $region31: #{tpu_custom_call.1} parent=5 // pred_region
        // Predicated region
        $region33: #{tpu_custom_call.1} parent=31 // pred_check
          %p204 = pneg %p47
        $region34: #{tpu_custom_call.1} parent=31 // pred_check_branch
          %206 = sbr.rel (%p204) target = $region36
        $region35: #{tpu_custom_call.1} parent=31 // pred_region
          %s207 = sand.u32 %s37, 1
          %s208 = sand.u32 %s37, 1
          %s209 = smul.addr %s208, 64
          %s210 = scalar_lea.vmem [#allocation3], %s209
          %s211 = smul.u32 8, %s20
          %s212 = smul.u32 2, %s21
          %s213 = smul.addr %s211, 4
          %s214 = sadd.s32 %s212, %s213
          %s215 = smul.addr %s214, 4
          %s216 = scalar_lea.vmem %s0, %s215
          // Predicated region
          $region37: #{tpu_custom_call.1} parent=35 // pred_check
            _
          $region38: #{tpu_custom_call.1} parent=35 // pred_check_branch
            %218 = sbr.rel (0) target = $region40
          $region39: #{tpu_custom_call.1} parent=35 // pred_region
            // Predicated region
            $region41: #{tpu_custom_call.1} parent=39 // pred_check
              _
            $region42: #{tpu_custom_call.1} parent=39 // pred_check_branch
              %220 = sbr.rel target = $region44
            $region43: #{tpu_custom_call.1} parent=39 // pred_region
              // Predicated region
              $region56: #{tpu_custom_call.1} parent=43 // pred_check
                _
              $region57: #{tpu_custom_call.1} parent=43 // pred_check_branch
                %265 = sbr.rel (0) target = $region59
              $region58: #{tpu_custom_call.1} parent=43 // pred_region
                loop: start=0, step=1, limit=1
                $region60: #{tpu_custom_call.1} parent=58 // loop_pre_header
                  _
                $region61: #{tpu_custom_call.1} parent=58 // loop_header
                  %s267 = sphi 0, %s271
                  %p268 = scmp.ge.s32.totalorder %s267, 1
                  %s272 = sphi %s216, %s216
                  %s273 = sphi %s210, %s210
                $region62: #{tpu_custom_call.1} parent=58 // loop_header_branch
                  %270 = sbr.rel (%p268) target = $region66
                $region63: #{tpu_custom_call.1} parent=58 // loop_body
                  _
                $region64: #{tpu_custom_call.1} parent=58 // loop_footer
                  %s271 = sadd.s32 1, %s267
                $region65: #{tpu_custom_call.1} parent=58 // loop_footer_branch
                  %266 = sbr.rel target = $region61
                $region66: #{tpu_custom_call.1} parent=58 // loop_exit
                  _
                loop: start=0, step=1, limit=1
                $region67: #{tpu_custom_call.1} parent=58 // loop_pre_header
                  _
                $region68: #{tpu_custom_call.1} parent=58 // loop_header
                  %s276 = sphi 0, %s280
                  %p277 = scmp.ge.s32.totalorder %s276, 1
                  %s281 = sphi %s216, %s216
                  %s282 = sphi %s210, %s210
                $region69: #{tpu_custom_call.1} parent=58 // loop_header_branch
                  %279 = sbr.rel (%p277) target = $region73
                $region70: #{tpu_custom_call.1} parent=58 // loop_body
                  %v283 = vld [vmem:[%s281] sm:$0xf]
                  %284 = vst [vmem:[%s282] sm:$0xf] %v283
                  %v285 = vld [vmem:[%s281 + $0x4] sm:$0xf]
                  %286 = vst [vmem:[%s282 + $0x4] sm:$0xf] %v285
                  %v287 = vld [vmem:[%s281 + $0x10] sm:$0xf]
                  %288 = vst [vmem:[%s282 + $0x8] sm:$0xf] %v287
                  %v289 = vld [vmem:[%s281 + $0x14] sm:$0xf]
                  %290 = vst [vmem:[%s282 + $0xc] sm:$0xf] %v289
                  %v291 = vld [vmem:[%s281 + $0x20] sm:$0xf]
                  %292 = vst [vmem:[%s282 + $0x10] sm:$0xf] %v291
                  %v293 = vld [vmem:[%s281 + $0x24] sm:$0xf]
                  %294 = vst [vmem:[%s282 + $0x14] sm:$0xf] %v293
                  %v295 = vld [vmem:[%s281 + $0x30] sm:$0xf]
                  %296 = vst [vmem:[%s282 + $0x18] sm:$0xf] %v295
                  %v297 = vld [vmem:[%s281 + $0x34] sm:$0xf]
                  %298 = vst [vmem:[%s282 + $0x1c] sm:$0xf] %v297
                  %v299 = vld [vmem:[%s281 + $0x40] sm:$0xf]
                  %300 = vst [vmem:[%s282 + $0x20] sm:$0xf] %v299
                  %v301 = vld [vmem:[%s281 + $0x44] sm:$0xf]
                  %302 = vst [vmem:[%s282 + $0x24] sm:$0xf] %v301
                  %v303 = vld [vmem:[%s281 + $0x50] sm:$0xf]
                  %304 = vst [vmem:[%s282 + $0x28] sm:$0xf] %v303
                  %v305 = vld [vmem:[%s281 + $0x54] sm:$0xf]
                  %306 = vst [vmem:[%s282 + $0x2c] sm:$0xf] %v305
                  %v307 = vld [vmem:[%s281 + $0x60] sm:$0xf]
                  %308 = vst [vmem:[%s282 + $0x30] sm:$0xf] %v307
                  %v309 = vld [vmem:[%s281 + $0x64] sm:$0xf]
                  %310 = vst [vmem:[%s282 + $0x34] sm:$0xf] %v309
                  %v311 = vld [vmem:[%s281 + $0x70] sm:$0xf]
                  %312 = vst [vmem:[%s282 + $0x38] sm:$0xf] %v311
                  %v313 = vld [vmem:[%s281 + $0x74] sm:$0xf]
                  %314 = vst [vmem:[%s282 + $0x3c] sm:$0xf] %v313
                $region71: #{tpu_custom_call.1} parent=58 // loop_footer
                  %s280 = sadd.s32 1, %s276
                $region72: #{tpu_custom_call.1} parent=58 // loop_footer_branch
                  %275 = sbr.rel target = $region68
                $region73: #{tpu_custom_call.1} parent=58 // loop_exit
                  _
              $region59: #{tpu_custom_call.1} parent=43 // pred_fallthru
                _
            $region44: #{tpu_custom_call.1} parent=39 // pred_fallthru
              _
            // Predicated region
            $region45: #{tpu_custom_call.1} parent=39 // pred_check
              _
            $region46: #{tpu_custom_call.1} parent=39 // pred_check_branch
              %222 = sbr.rel (0) target = $region48
            $region47: #{tpu_custom_call.1} parent=39 // pred_region
              loop: start=0, step=1, limit=1
              $region49: #{tpu_custom_call.1} parent=47 // loop_pre_header
                _
              $region50: #{tpu_custom_call.1} parent=47 // loop_header
                %s225 = sphi 0, %s229
                %p226 = scmp.ge.s32.totalorder %s225, 1
                %s230 = sphi %s216, %s216
                %s231 = sphi %s210, %s210
              $region51: #{tpu_custom_call.1} parent=47 // loop_header_branch
                %228 = sbr.rel (%p226) target = $region55
              $region52: #{tpu_custom_call.1} parent=47 // loop_body
                %v232 = vld [vmem:[%s230] sm:$0xf]
                %233 = vst [vmem:[%s231] sm:$0xf] %v232
                %v234 = vld [vmem:[%s230 + $0x4] sm:$0xf]
                %235 = vst [vmem:[%s231 + $0x4] sm:$0xf] %v234
                %v236 = vld [vmem:[%s230 + $0x10] sm:$0xf]
                %237 = vst [vmem:[%s231 + $0x8] sm:$0xf] %v236
                %v238 = vld [vmem:[%s230 + $0x14] sm:$0xf]
                %239 = vst [vmem:[%s231 + $0xc] sm:$0xf] %v238
                %v240 = vld [vmem:[%s230 + $0x20] sm:$0xf]
                %241 = vst [vmem:[%s231 + $0x10] sm:$0xf] %v240
                %v242 = vld [vmem:[%s230 + $0x24] sm:$0xf]
                %243 = vst [vmem:[%s231 + $0x14] sm:$0xf] %v242
                %v244 = vld [vmem:[%s230 + $0x30] sm:$0xf]
                %245 = vst [vmem:[%s231 + $0x18] sm:$0xf] %v244
                %v246 = vld [vmem:[%s230 + $0x34] sm:$0xf]
                %247 = vst [vmem:[%s231 + $0x1c] sm:$0xf] %v246
                %v248 = vld [vmem:[%s230 + $0x40] sm:$0xf]
                %249 = vst [vmem:[%s231 + $0x20] sm:$0xf] %v248
                %v250 = vld [vmem:[%s230 + $0x44] sm:$0xf]
                %251 = vst [vmem:[%s231 + $0x24] sm:$0xf] %v250
                %v252 = vld [vmem:[%s230 + $0x50] sm:$0xf]
                %253 = vst [vmem:[%s231 + $0x28] sm:$0xf] %v252
                %v254 = vld [vmem:[%s230 + $0x54] sm:$0xf]
                %255 = vst [vmem:[%s231 + $0x2c] sm:$0xf] %v254
                %v256 = vld [vmem:[%s230 + $0x60] sm:$0xf]
                %257 = vst [vmem:[%s231 + $0x30] sm:$0xf] %v256
                %v258 = vld [vmem:[%s230 + $0x64] sm:$0xf]
                %259 = vst [vmem:[%s231 + $0x34] sm:$0xf] %v258
                %v260 = vld [vmem:[%s230 + $0x70] sm:$0xf]
                %261 = vst [vmem:[%s231 + $0x38] sm:$0xf] %v260
                %v262 = vld [vmem:[%s230 + $0x74] sm:$0xf]
                %263 = vst [vmem:[%s231 + $0x3c] sm:$0xf] %v262
              $region53: #{tpu_custom_call.1} parent=47 // loop_footer
                %s229 = sadd.s32 1, %s225
              $region54: #{tpu_custom_call.1} parent=47 // loop_footer_branch
                %224 = sbr.rel target = $region50
              $region55: #{tpu_custom_call.1} parent=47 // loop_exit
                _
            $region48: #{tpu_custom_call.1} parent=39 // pred_fallthru
              _
          $region40: #{tpu_custom_call.1} parent=35 // pred_fallthru
            _
          %315 = vnop
        $region36: #{tpu_custom_call.1} parent=31 // pred_fallthru
          _
      $region32: #{tpu_custom_call.1} parent=5 // pred_fallthru
        _
      %p316 = scmp.le.s32.totalorder 1, %s13
      %p317 = scmp.lt.s32.totalorder %s13, 3
      %p318 = pnand %p316, %p317
      %p319 = pneg %p318
      // Predicated region
      $region74: #{tpu_custom_call.1} parent=5 // pred_check
        _
      $region75: #{tpu_custom_call.1} parent=5 // pred_check_branch
        %321 = sbr.rel (%p318) target = $region77
      $region76: #{tpu_custom_call.1} parent=5 // pred_region
        %s322 = ssub.s32 %s13, 1
        %s323 = sand.u32 %s40, 1
        %s324 = sand.u32 %s40, 1
        %s325 = smul.addr %s324, 64
        %s326 = scalar_lea.vmem [#allocation3], %s325
        // Predicated region
        $region78: #{tpu_custom_call.1} parent=76 // pred_check
          %p327 = pneg %p53
        $region79: #{tpu_custom_call.1} parent=76 // pred_check_branch
          %329 = sbr.rel (%p327) target = $region81
        $region80: #{tpu_custom_call.1} parent=76 // pred_region
          _
        $region81: #{tpu_custom_call.1} parent=76 // pred_fallthru
          _
        // Predicated region
        $region82: #{tpu_custom_call.1} parent=76 // pred_check
          %p330 = pneg %p116
        $region83: #{tpu_custom_call.1} parent=76 // pred_check_branch
          %332 = sbr.rel (%p330) target = $region85
        $region84: #{tpu_custom_call.1} parent=76 // pred_region
          %333 = dma.done [#allocation5], 8192
        $region85: #{tpu_custom_call.1} parent=76 // pred_fallthru
          _
        %s334 = sand.u32 %s40, 1
        %s335 = sand.u32 %s40, 1
        %s336 = smul.addr %s335, 64
        %s337 = scalar_lea.vmem [#allocation3], %s336
        %p338 = pneg %p53
        %p339 = pneg %p50
        %p340 = pneg %p74
        %p341 = pneg %p71
        %p342 = pneg %p95
        %p343 = pneg %p92
        %p344 = pneg %p116
        %p345 = pneg %p113
        %p346 = pneg %p137
        %p347 = pneg %p134
        %p348 = pneg %p163
        %p349 = pneg %p160
        %s350 = smul.u32 8, %s22
        %s351 = smul.u32 2, %s23
        %p352 = scmp.eq.s32.totalorder %s23, 0
        // Predicated region
        $region86: #{tpu_custom_call.1} parent=76 // pred_check
          %p353 = pneg %p352
        $region87: #{tpu_custom_call.1} parent=76 // pred_check_branch
          %355 = sbr.rel (%p353) target = $region89
        $region88: #{tpu_custom_call.1} parent=76 // pred_region
          %vm356 = vcmask 130048
          %357 = vst.msk [vmem:[#allocation2] sm:$0xff] %vm356, 0.0
        $region89: #{tpu_custom_call.1} parent=76 // pred_fallthru
          _
        %v358 = vld [vmem:[#allocation2] sm:$0xff]
        %v359 = vld [vmem:[%s326] sm:$0xf]
        %v360 = vld [vmem:[%s326 + $0x4] sm:$0xf]
        %v361 = vld [vmem:[%s326 + $0x8] sm:$0xf]
        %v362 = vld [vmem:[%s326 + $0xc] sm:$0xf]
        %v363 = vld [vmem:[%s326 + $0x10] sm:$0xf]
        %v364 = vld [vmem:[%s326 + $0x14] sm:$0xf]
        %v365 = vld [vmem:[%s326 + $0x18] sm:$0xf]
        %v366 = vld [vmem:[%s326 + $0x1c] sm:$0xf]
        %v367 = vld [vmem:[%s326 + $0x20] sm:$0xf]
        %v368 = vld [vmem:[%s326 + $0x24] sm:$0xf]
        %v369 = vld [vmem:[%s326 + $0x28] sm:$0xf]
        %v370 = vld [vmem:[%s326 + $0x2c] sm:$0xf]
        %v371 = vld [vmem:[%s326 + $0x30] sm:$0xf]
        %v372 = vld [vmem:[%s326 + $0x34] sm:$0xf]
        %v373 = vld [vmem:[%s326 + $0x38] sm:$0xf]
        %v374 = vld [vmem:[%s326 + $0x3c] sm:$0xf]
        %v375 = vunpack.c.l.bf16 %v359
        %v376 = vunpack.c.l.bf16 %v360
        %v377 = vunpack.c.l.bf16 %v361
        %v378 = vunpack.c.l.bf16 %v362
        %v379 = vunpack.c.l.bf16 %v363
        %v380 = vunpack.c.l.bf16 %v364
        %v381 = vunpack.c.l.bf16 %v365
        %v382 = vunpack.c.l.bf16 %v366
        %v383 = vunpack.c.l.bf16 %v367
        %v384 = vunpack.c.l.bf16 %v368
        %v385 = vunpack.c.l.bf16 %v369
        %v386 = vunpack.c.l.bf16 %v370
        %v387 = vunpack.c.l.bf16 %v371
        %v388 = vunpack.c.l.bf16 %v372
        %v389 = vunpack.c.l.bf16 %v373
        %v390 = vunpack.c.l.bf16 %v374
        %vm391 = vcmask 130048
        %v392 = vsel %vm391, %v375, 0.0
        %v393 = vsel %vm391, %v376, 0.0
        %v394 = vadd.f32 %v392, %v393
        %v395 = vrot.slane %v394, 4
        %v396 = vadd.f32 %v394, %v395
        %v397 = vrot.slane %v396, 2
        %v398 = vadd.f32 %v396, %v397
        %v399 = vrot.slane %v398, 1
        %v400 = vadd.f32 %v398, %v399
        %v401 = vsel %vm391, %v377, 0.0
        %v402 = vsel %vm391, %v378, 0.0
        %v403 = vadd.f32 %v401, %v402
        %v404 = vrot.slane %v403, 4
        %v405 = vadd.f32 %v403, %v404
        %v406 = vrot.slane %v405, 2
        %v407 = vadd.f32 %v405, %v406
        %v408 = vrot.slane %v407, 1
        %v409 = vadd.f32 %v407, %v408
        %v410 = vsel %vm391, %v379, 0.0
        %v411 = vsel %vm391, %v380, 0.0
        %v412 = vadd.f32 %v410, %v411
        %v413 = vrot.slane %v412, 4
        %v414 = vadd.f32 %v412, %v413
        %v415 = vrot.slane %v414, 2
        %v416 = vadd.f32 %v414, %v415
        %v417 = vrot.slane %v416, 1
        %v418 = vadd.f32 %v416, %v417
        %v419 = vsel %vm391, %v381, 0.0
        %v420 = vsel %vm391, %v382, 0.0
        %v421 = vadd.f32 %v419, %v420
        %v422 = vrot.slane %v421, 4
        %v423 = vadd.f32 %v421, %v422
        %v424 = vrot.slane %v423, 2
        %v425 = vadd.f32 %v423, %v424
        %v426 = vrot.slane %v425, 1
        %v427 = vadd.f32 %v425, %v426
        %v428 = vsel %vm391, %v383, 0.0
        %v429 = vsel %vm391, %v384, 0.0
        %v430 = vadd.f32 %v428, %v429
        %v431 = vrot.slane %v430, 4
        %v432 = vadd.f32 %v430, %v431
        %v433 = vrot.slane %v432, 2
        %v434 = vadd.f32 %v432, %v433
        %v435 = vrot.slane %v434, 1
        %v436 = vadd.f32 %v434, %v435
        %v437 = vsel %vm391, %v385, 0.0
        %v438 = vsel %vm391, %v386, 0.0
        %v439 = vadd.f32 %v437, %v438
        %v440 = vrot.slane %v439, 4
        %v441 = vadd.f32 %v439, %v440
        %v442 = vrot.slane %v441, 2
        %v443 = vadd.f32 %v441, %v442
        %v444 = vrot.slane %v443, 1
        %v445 = vadd.f32 %v443, %v444
        %v446 = vsel %vm391, %v387, 0.0
        %v447 = vsel %vm391, %v388, 0.0
        %v448 = vadd.f32 %v446, %v447
        %v449 = vrot.slane %v448, 4
        %v450 = vadd.f32 %v448, %v449
        %v451 = vrot.slane %v450, 2
        %v452 = vadd.f32 %v450, %v451
        %v453 = vrot.slane %v452, 1
        %v454 = vadd.f32 %v452, %v453
        %v455 = vsel %vm391, %v389, 0.0
        %v456 = vsel %vm391, %v390, 0.0
        %v457 = vadd.f32 %v455, %v456
        %v458 = vrot.slane %v457, 4
        %v459 = vadd.f32 %v457, %v458
        %v460 = vrot.slane %v459, 2
        %v461 = vadd.f32 %v459, %v460
        %v462 = vrot.slane %v461, 1
        %v463 = vadd.f32 %v461, %v462
        %vm472 = vcmask 1041409
        %v473 = vsel %vm472, %v409, %v400
        %vm474 = vcmask 1042434
        %v475 = vsel %vm474, %v418, %v473
        %vm476 = vcmask 1043459
        %v477 = vsel %vm476, %v427, %v475
        %vm478 = vcmask 1044484
        %v479 = vsel %vm478, %v436, %v477
        %vm480 = vcmask 1045509
        %v481 = vsel %vm480, %v445, %v479
        %vm482 = vcmask 1046534
        %v483 = vsel %vm482, %v454, %v481
        %vm484 = vcmask 1047559
        %v485 = vsel %vm484, %v463, %v483
        %v487 = vadd.f32 %v358, %v485
        %488 = vst.msk [vmem:[#allocation2] sm:$0xff] %vm391, %v487
        %p489 = scmp.eq.s32.totalorder %s23, 1
        // Predicated region
        $region90: #{tpu_custom_call.1} parent=76 // pred_check
          %p490 = pneg %p489
        $region91: #{tpu_custom_call.1} parent=76 // pred_check_branch
          %492 = sbr.rel (%p490) target = $region93
        $region92: #{tpu_custom_call.1} parent=76 // pred_region
          %v493 = vld [vmem:[#allocation2] sm:$0xff]
          %v494 = vmul.f32 %v493, 0.03125
          %v495 = vld [vmem:[%s1] sm:$0xff]
          %v496 = vld [vmem:[%s1 + $0x8] sm:$0xff]
          %v497 = vld [vmem:[%s1 + $0x10] sm:$0xff]
          %v498 = vld [vmem:[%s1 + $0x18] sm:$0xff]
          %v499 = vld [vmem:[%s1 + $0x20] sm:$0xff]
          %v500 = vld [vmem:[%s1 + $0x28] sm:$0xff]
          %v501 = vld [vmem:[%s1 + $0x30] sm:$0xff]
          %v502 = vld [vmem:[%s1 + $0x38] sm:$0xff]
          %v503 = vld [vmem:[%s2] sm:$0xf]
          %v505 = vlaneseq
          %v506 = vshrl.u32 %v505, 7
          %v507 = vsub.s32 0, %v506
          %v508 = vrot.slane %v503, %v507
          %v509 = vlaneseq
          %v510 = vshrl.u32 %v509, 7
          %v511 = vsub.s32 1, %v510
          %v512 = vrot.slane %v503, %v511
          %v513 = vlaneseq
          %v514 = vshrl.u32 %v513, 7
          %v515 = vsub.s32 2, %v514
          %v516 = vrot.slane %v503, %v515
          %v517 = vlaneseq
          %v518 = vshrl.u32 %v517, 7
          %v519 = vsub.s32 3, %v518
          %v520 = vrot.slane %v503, %v519
          %v526 = vsel %vm391, %v494, 0
          %528 = vmatprep.subr.mxu0 %v496
          %529 = vmatpush1.msra.mxu0 %v495
          %530 = vmatprep.subr.mxu0 %v500
          %531 = vmatpush1.msra.mxu0 %v499
          %532 = vmatprep.subr.mxu0 0.0
          %533 = vmatpush1.msra.mxu0 0.0
          %534 = vmatprep.subr.mxu0 0.0
          %535 = vmatpush1.msra.mxu0 0.0
          %536 = vmatprep.subr.mxu0 0.0
          %537 = vmatpush1.msra.mxu0 0.0
          %538 = vmatprep.subr.mxu0 0.0
          %539 = vmatpush1.msra.mxu0 0.0
          %540 = vmatprep.subr.mxu0 0.0
          %541 = vmatpush1.msra.mxu0 0.0
          %542 = vmatprep.subr.mxu0 0.0
          %543 = vmatpush1.msra.mxu0 0.0
          %544 = vmatprep.subr.mxu0 0.0
          %545 = vmatpush1.msra.mxu0 0.0
          %546 = vmatprep.subr.mxu0 0.0
          %547 = vmatpush1.msra.mxu0 0.0
          %548 = vmatprep.subr.mxu0 0.0
          %549 = vmatpush1.msra.mxu0 0.0
          %550 = vmatprep.subr.mxu0 0.0
          %551 = vmatpush1.msra.mxu0 0.0
          %552 = vmatprep.subr.mxu0 0.0
          %553 = vmatpush1.msra.mxu0 0.0
          %554 = vmatprep.subr.mxu0 0.0
          %555 = vmatpush1.msra.mxu0 0.0
          %556 = vmatprep.subr.mxu0 0.0
          %557 = vmatpush1.msra.mxu0 0.0
          %558 = vmatprep.subr.mxu0 0.0
          %559 = vmatpush1.msra.mxu0 0.0
          %560 = vmatprep.subr.mxu0 0.0
          %561 = vmatpush1.msra.mxu0 0.0
          %562 = vmatprep.subr.mxu0 0.0
          %563 = vmatpush1.msra.mxu0 0.0
          %564 = vmatprep.subr.mxu0 0.0
          %565 = vmatpush1.msra.mxu0 0.0
          %566 = vmatprep.subr.mxu0 0.0
          %567 = vmatpush1.msra.mxu0 0.0
          %568 = vmatprep.subr.mxu0 0.0
          %569 = vmatpush1.msra.mxu0 0.0
          %570 = vmatprep.subr.mxu0 0.0
          %571 = vmatpush1.msra.mxu0 0.0
          %572 = vmatprep.subr.mxu0 0.0
          %573 = vmatpush1.msra.mxu0 0.0
          %574 = vmatprep.subr.mxu0 0.0
          %575 = vmatpush1.msra.mxu0 0.0
          %576 = vmatprep.subr.mxu0 0.0
          %577 = vmatpush1.msra.mxu0 0.0
          %578 = vmatprep.subr.mxu0 0.0
          %579 = vmatpush1.msra.mxu0 0.0
          %580 = vmatprep.subr.mxu0 0.0
          %581 = vmatpush1.msra.mxu0 0.0
          %582 = vmatprep.subr.mxu0 0.0
          %583 = vmatpush1.msra.mxu0 0.0
          %584 = vmatprep.subr.mxu0 0.0
          %585 = vmatpush1.msra.mxu0 0.0
          %586 = vmatprep.subr.mxu0 0.0
          %587 = vmatpush1.msra.mxu0 0.0
          %588 = vmatprep.subr.mxu0 0.0
          %589 = vmatpush1.msra.mxu0 0.0
          %590 = vmatprep.subr.mxu0 0.0
          %591 = vmatpush1.msra.mxu0 0.0
          %592 = vmatprep.mubr.f32.mxu0 0.0
          %593 = vmatmul.mubr.f32.gmra.mrb[0].mxu0 %v526
          %v594 = vpop.f32.mrb[0].mxu0
          %v595 = vadd.f32 %v508, %v594
          %v596 = vpop.f32.mrb[0].mxu0
          %v597 = vadd.f32 %v512, %v596
          %598 = vdwg.mxu0
          %599 = vmatprep.subr.mxu0 %v498
          %600 = vmatpush1.msra.mxu0 %v497
          %601 = vmatprep.subr.mxu0 %v502
          %602 = vmatpush1.msra.mxu0 %v501
          %603 = vmatprep.subr.mxu0 0.0
          %604 = vmatpush1.msra.mxu0 0.0
          %605 = vmatprep.subr.mxu0 0.0
          %606 = vmatpush1.msra.mxu0 0.0
          %607 = vmatprep.subr.mxu0 0.0
          %608 = vmatpush1.msra.mxu0 0.0
          %609 = vmatprep.subr.mxu0 0.0
          %610 = vmatpush1.msra.mxu0 0.0
          %611 = vmatprep.subr.mxu0 0.0
          %612 = vmatpush1.msra.mxu0 0.0
          %613 = vmatprep.subr.mxu0 0.0
          %614 = vmatpush1.msra.mxu0 0.0
          %615 = vmatprep.subr.mxu0 0.0
          %616 = vmatpush1.msra.mxu0 0.0
          %617 = vmatprep.subr.mxu0 0.0
          %618 = vmatpush1.msra.mxu0 0.0
          %619 = vmatprep.subr.mxu0 0.0
          %620 = vmatpush1.msra.mxu0 0.0
          %621 = vmatprep.subr.mxu0 0.0
          %622 = vmatpush1.msra.mxu0 0.0
          %623 = vmatprep.subr.mxu0 0.0
          %624 = vmatpush1.msra.mxu0 0.0
          %625 = vmatprep.subr.mxu0 0.0
          %626 = vmatpush1.msra.mxu0 0.0
          %627 = vmatprep.subr.mxu0 0.0
          %628 = vmatpush1.msra.mxu0 0.0
          %629 = vmatprep.subr.mxu0 0.0
          %630 = vmatpush1.msra.mxu0 0.0
          %631 = vmatprep.subr.mxu0 0.0
          %632 = vmatpush1.msra.mxu0 0.0
          %633 = vmatprep.subr.mxu0 0.0
          %634 = vmatpush1.msra.mxu0 0.0
          %635 = vmatprep.subr.mxu0 0.0
          %636 = vmatpush1.msra.mxu0 0.0
          %637 = vmatprep.subr.mxu0 0.0
          %638 = vmatpush1.msra.mxu0 0.0
          %639 = vmatprep.subr.mxu0 0.0
          %640 = vmatpush1.msra.mxu0 0.0
          %641 = vmatprep.subr.mxu0 0.0
          %642 = vmatpush1.msra.mxu0 0.0
          %643 = vmatprep.subr.mxu0 0.0
          %644 = vmatpush1.msra.mxu0 0.0
          %645 = vmatprep.subr.mxu0 0.0
          %646 = vmatpush1.msra.mxu0 0.0
          %647 = vmatprep.subr.mxu0 0.0
          %648 = vmatpush1.msra.mxu0 0.0
          %649 = vmatprep.subr.mxu0 0.0
          %650 = vmatpush1.msra.mxu0 0.0
          %651 = vmatprep.subr.mxu0 0.0
          %652 = vmatpush1.msra.mxu0 0.0
          %653 = vmatprep.subr.mxu0 0.0
          %654 = vmatpush1.msra.mxu0 0.0
          %655 = vmatprep.subr.mxu0 0.0
          %656 = vmatpush1.msra.mxu0 0.0
          %657 = vmatprep.subr.mxu0 0.0
          %658 = vmatpush1.msra.mxu0 0.0
          %659 = vmatprep.subr.mxu0 0.0
          %660 = vmatpush1.msra.mxu0 0.0
          %661 = vmatprep.subr.mxu0 0.0
          %662 = vmatpush1.msra.mxu0 0.0
          %663 = vmatprep.mubr.f32.mxu0 0.0
          %664 = vmatmul.mubr.f32.gmra.mrb[0].mxu0 %v526
          %v665 = vpop.f32.mrb[0].mxu0
          %v666 = vadd.f32 %v516, %v665
          %v667 = vpop.f32.mrb[0].mxu0
          %v668 = vadd.f32 %v520, %v667
          %669 = vdwg.mxu0
          %v670 = vld [vmem:[#allocation4] sm:$0xff]
          %v671 = vld [vmem:[#allocation4 + $0x8] sm:$0xff]
          %v672 = vld [vmem:[#allocation4 + $0x10] sm:$0xff]
          %v673 = vld [vmem:[#allocation4 + $0x18] sm:$0xff]
          %v674 = vld [vmem:[#allocation4 + $0x20] sm:$0xff]
          %v675 = vld [vmem:[#allocation4 + $0x28] sm:$0xff]
          %v676 = vld [vmem:[#allocation4 + $0x30] sm:$0xff]
          %v677 = vld [vmem:[#allocation4 + $0x38] sm:$0xff]
          %v678 = vld [vmem:[#allocation4 + $0x40] sm:$0xff]
          %v679 = vld [vmem:[#allocation4 + $0x48] sm:$0xff]
          %v680 = vld [vmem:[#allocation4 + $0x50] sm:$0xff]
          %v681 = vld [vmem:[#allocation4 + $0x58] sm:$0xff]
          %v682 = vld [vmem:[#allocation4 + $0x60] sm:$0xff]
          %v683 = vld [vmem:[#allocation4 + $0x68] sm:$0xff]
          %v684 = vld [vmem:[#allocation4 + $0x70] sm:$0xff]
          %v685 = vld [vmem:[#allocation4 + $0x78] sm:$0xff]
          %v686 = vld [vmem:[#allocation4 + $0x80] sm:$0xff]
          %v687 = vld [vmem:[#allocation4 + $0x88] sm:$0xff]
          %v688 = vld [vmem:[#allocation4 + $0x90] sm:$0xff]
          %v689 = vld [vmem:[#allocation4 + $0x98] sm:$0xff]
          %v690 = vld [vmem:[#allocation4 + $0xa0] sm:$0xff]
          %v691 = vld [vmem:[#allocation4 + $0xa8] sm:$0xff]
          %v692 = vld [vmem:[#allocation4 + $0xb0] sm:$0xff]
          %v693 = vld [vmem:[#allocation4 + $0xb8] sm:$0xff]
          %v694 = vld [vmem:[#allocation4 + $0xc0] sm:$0xff]
          %v695 = vld [vmem:[#allocation4 + $0xc8] sm:$0xff]
          %v696 = vld [vmem:[#allocation4 + $0xd0] sm:$0xff]
          %v697 = vld [vmem:[#allocation4 + $0xd8] sm:$0xff]
          %v698 = vld [vmem:[#allocation4 + $0xe0] sm:$0xff]
          %v699 = vld [vmem:[#allocation4 + $0xe8] sm:$0xff]
          %v700 = vld [vmem:[#allocation4 + $0xf0] sm:$0xff]
          %v701 = vld [vmem:[#allocation4 + $0xf8] sm:$0xff]
          %v702 = vld [vmem:[#allocation4 + $0x100] sm:$0xff]
          %v703 = vld [vmem:[#allocation4 + $0x108] sm:$0xff]
          %v704 = vld [vmem:[#allocation4 + $0x110] sm:$0xff]
          %v705 = vld [vmem:[#allocation4 + $0x118] sm:$0xff]
          %v706 = vld [vmem:[#allocation4 + $0x120] sm:$0xff]
          %v707 = vld [vmem:[#allocation4 + $0x128] sm:$0xff]
          %v708 = vld [vmem:[#allocation4 + $0x130] sm:$0xff]
          %v709 = vld [vmem:[#allocation4 + $0x138] sm:$0xff]
          %v710 = vld [vmem:[#allocation4 + $0x140] sm:$0xff]
          %v711 = vld [vmem:[#allocation4 + $0x148] sm:$0xff]
          %v712 = vld [vmem:[#allocation4 + $0x150] sm:$0xff]
          %v713 = vld [vmem:[#allocation4 + $0x158] sm:$0xff]
          %v714 = vld [vmem:[#allocation4 + $0x160] sm:$0xff]
          %v715 = vld [vmem:[#allocation4 + $0x168] sm:$0xff]
          %v716 = vld [vmem:[#allocation4 + $0x170] sm:$0xff]
          %v717 = vld [vmem:[#allocation4 + $0x178] sm:$0xff]
          %v718 = vld [vmem:[#allocation4 + $0x180] sm:$0xff]
          %v719 = vld [vmem:[#allocation4 + $0x188] sm:$0xff]
          %v720 = vld [vmem:[#allocation4 + $0x190] sm:$0xff]
          %v721 = vld [vmem:[#allocation4 + $0x198] sm:$0xff]
          %v722 = vld [vmem:[#allocation4 + $0x1a0] sm:$0xff]
          %v723 = vld [vmem:[#allocation4 + $0x1a8] sm:$0xff]
          %v724 = vld [vmem:[#allocation4 + $0x1b0] sm:$0xff]
          %v725 = vld [vmem:[#allocation4 + $0x1b8] sm:$0xff]
          %v726 = vld [vmem:[#allocation4 + $0x1c0] sm:$0xff]
          %v727 = vld [vmem:[#allocation4 + $0x1c8] sm:$0xff]
          %v728 = vld [vmem:[#allocation4 + $0x1d0] sm:$0xff]
          %v729 = vld [vmem:[#allocation4 + $0x1d8] sm:$0xff]
          %v730 = vld [vmem:[#allocation4 + $0x1e0] sm:$0xff]
          %v731 = vld [vmem:[#allocation4 + $0x1e8] sm:$0xff]
          %v732 = vld [vmem:[#allocation4 + $0x1f0] sm:$0xff]
          %v733 = vld [vmem:[#allocation4 + $0x1f8] sm:$0xff]
          %v734 = vld [vmem:[%s4] sm:$0x1]
          %v736 = vlaneseq
          %v737 = vshrl.u32 %v736, 7
          %v738 = vsub.s32 0, %v737
          %v739 = vrot.slane %v734, %v738
          %741 = vmatprep.subr.mxu0 0.0
          %742 = vmatpush1.msra.mxu0 %v670
          %743 = vmatprep.subr.mxu0 0.0
          %744 = vmatpush1.msra.mxu0 %v671
          %745 = vmatprep.subr.mxu0 0.0
          %746 = vmatpush1.msra.mxu0 %v672
          %747 = vmatprep.subr.mxu0 0.0
          %748 = vmatpush1.msra.mxu0 %v673
          %749 = vmatprep.subr.mxu0 0.0
          %750 = vmatpush1.msra.mxu0 %v674
          %751 = vmatprep.subr.mxu0 0.0
          %752 = vmatpush1.msra.mxu0 %v675
          %753 = vmatprep.subr.mxu0 0.0
          %754 = vmatpush1.msra.mxu0 %v676
          %755 = vmatprep.subr.mxu0 0.0
          %756 = vmatpush1.msra.mxu0 %v677
          %757 = vmatprep.subr.mxu0 0.0
          %758 = vmatpush1.msra.mxu0 %v678
          %759 = vmatprep.subr.mxu0 0.0
          %760 = vmatpush1.msra.mxu0 %v679
          %761 = vmatprep.subr.mxu0 0.0
          %762 = vmatpush1.msra.mxu0 %v680
          %763 = vmatprep.subr.mxu0 0.0
          %764 = vmatpush1.msra.mxu0 %v681
          %765 = vmatprep.subr.mxu0 0.0
          %766 = vmatpush1.msra.mxu0 %v682
          %767 = vmatprep.subr.mxu0 0.0
          %768 = vmatpush1.msra.mxu0 %v683
          %769 = vmatprep.subr.mxu0 0.0
          %770 = vmatpush1.msra.mxu0 %v684
          %771 = vmatprep.subr.mxu0 0.0
          %772 = vmatpush1.msra.mxu0 %v685
          %773 = vmatprep.subr.mxu0 0.0
          %774 = vmatpush1.msra.mxu0 %v686
          %775 = vmatprep.subr.mxu0 0.0
          %776 = vmatpush1.msra.mxu0 %v687
          %777 = vmatprep.subr.mxu0 0.0
          %778 = vmatpush1.msra.mxu0 %v688
          %779 = vmatprep.subr.mxu0 0.0
          %780 = vmatpush1.msra.mxu0 %v689
          %781 = vmatprep.subr.mxu0 0.0
          %782 = vmatpush1.msra.mxu0 %v690
          %783 = vmatprep.subr.mxu0 0.0
          %784 = vmatpush1.msra.mxu0 %v691
          %785 = vmatprep.subr.mxu0 0.0
          %786 = vmatpush1.msra.mxu0 %v692
          %787 = vmatprep.subr.mxu0 0.0
          %788 = vmatpush1.msra.mxu0 %v693
          %789 = vmatprep.subr.mxu0 0.0
          %790 = vmatpush1.msra.mxu0 %v694
          %791 = vmatprep.subr.mxu0 0.0
          %792 = vmatpush1.msra.mxu0 %v695
          %793 = vmatprep.subr.mxu0 0.0
          %794 = vmatpush1.msra.mxu0 %v696
          %795 = vmatprep.subr.mxu0 0.0
          %796 = vmatpush1.msra.mxu0 %v697
          %797 = vmatprep.subr.mxu0 0.0
          %798 = vmatpush1.msra.mxu0 %v698
          %799 = vmatprep.subr.mxu0 0.0
          %800 = vmatpush1.msra.mxu0 %v699
          %801 = vmatprep.subr.mxu0 0.0
          %802 = vmatpush1.msra.mxu0 %v700
          %803 = vmatprep.subr.mxu0 0.0
          %804 = vmatpush1.msra.mxu0 %v701
          %805 = vmatprep.mubr.f32.mxu0 %v597
          %806 = vmatmul.mubr.f32.gmra.mrb[0].mxu0 %v595
          %v807 = vpop.f32.mrb[0].mxu0
          %v808 = vadd.f32 %v739, %v807
          %v809 = vpop.f32.mrb[0].mxu0
          %810 = vdwg.mxu0
          %811 = vmatprep.subr.mxu0 0.0
          %812 = vmatpush1.msra.mxu0 %v702
          %813 = vmatprep.subr.mxu0 0.0
          %814 = vmatpush1.msra.mxu0 %v703
          %815 = vmatprep.subr.mxu0 0.0
          %816 = vmatpush1.msra.mxu0 %v704
          %817 = vmatprep.subr.mxu0 0.0
          %818 = vmatpush1.msra.mxu0 %v705
          %819 = vmatprep.subr.mxu0 0.0
          %820 = vmatpush1.msra.mxu0 %v706
          %821 = vmatprep.subr.mxu0 0.0
          %822 = vmatpush1.msra.mxu0 %v707
          %823 = vmatprep.subr.mxu0 0.0
          %824 = vmatpush1.msra.mxu0 %v708
          %825 = vmatprep.subr.mxu0 0.0
          %826 = vmatpush1.msra.mxu0 %v709
          %827 = vmatprep.subr.mxu0 0.0
          %828 = vmatpush1.msra.mxu0 %v710
          %829 = vmatprep.subr.mxu0 0.0
          %830 = vmatpush1.msra.mxu0 %v711
          %831 = vmatprep.subr.mxu0 0.0
          %832 = vmatpush1.msra.mxu0 %v712
          %833 = vmatprep.subr.mxu0 0.0
          %834 = vmatpush1.msra.mxu0 %v713
          %835 = vmatprep.subr.mxu0 0.0
          %836 = vmatpush1.msra.mxu0 %v714
          %837 = vmatprep.subr.mxu0 0.0
          %838 = vmatpush1.msra.mxu0 %v715
          %839 = vmatprep.subr.mxu0 0.0
          %840 = vmatpush1.msra.mxu0 %v716
          %841 = vmatprep.subr.mxu0 0.0
          %842 = vmatpush1.msra.mxu0 %v717
          %843 = vmatprep.subr.mxu0 0.0
          %844 = vmatpush1.msra.mxu0 %v718
          %845 = vmatprep.subr.mxu0 0.0
          %846 = vmatpush1.msra.mxu0 %v719
          %847 = vmatprep.subr.mxu0 0.0
          %848 = vmatpush1.msra.mxu0 %v720
          %849 = vmatprep.subr.mxu0 0.0
          %850 = vmatpush1.msra.mxu0 %v721
          %851 = vmatprep.subr.mxu0 0.0
          %852 = vmatpush1.msra.mxu0 %v722
          %853 = vmatprep.subr.mxu0 0.0
          %854 = vmatpush1.msra.mxu0 %v723
          %855 = vmatprep.subr.mxu0 0.0
          %856 = vmatpush1.msra.mxu0 %v724
          %857 = vmatprep.subr.mxu0 0.0
          %858 = vmatpush1.msra.mxu0 %v725
          %859 = vmatprep.subr.mxu0 0.0
          %860 = vmatpush1.msra.mxu0 %v726
          %861 = vmatprep.subr.mxu0 0.0
          %862 = vmatpush1.msra.mxu0 %v727
          %863 = vmatprep.subr.mxu0 0.0
          %864 = vmatpush1.msra.mxu0 %v728
          %865 = vmatprep.subr.mxu0 0.0
          %866 = vmatpush1.msra.mxu0 %v729
          %867 = vmatprep.subr.mxu0 0.0
          %868 = vmatpush1.msra.mxu0 %v730
          %869 = vmatprep.subr.mxu0 0.0
          %870 = vmatpush1.msra.mxu0 %v731
          %871 = vmatprep.subr.mxu0 0.0
          %872 = vmatpush1.msra.mxu0 %v732
          %873 = vmatprep.subr.mxu0 0.0
          %874 = vmatpush1.msra.mxu0 %v733
          %875 = vmatprep.mubr.f32.mxu0 %v668
          %876 = vmatmul.mubr.f32.gmra.mrb[0].mxu0 %v666
          %v877 = vpop.f32.mrb[0].mxu0
          %v878 = vadd.f32 %v808, %v877
          %v879 = vpop.f32.mrb[0].mxu0
          %880 = vdwg.mxu0
          %881 = vst [vmem:[#allocation7] sm:$0xff] %v878
        $region93: #{tpu_custom_call.1} parent=76 // pred_fallthru
          _
        // Predicated region
        $region94: #{tpu_custom_call.1} parent=76 // pred_check
          %p882 = pneg %p160
        $region95: #{tpu_custom_call.1} parent=76 // pred_check_branch
          %884 = sbr.rel (%p882) target = $region97
        $region96: #{tpu_custom_call.1} parent=76 // pred_region
          %s886 = ssub.s32 128, 128
          %887 = vsyncadd [#allocation6], %s886
          %s888 = smul.addr %s22, 128
          %s889 = scalar_lea.hbm %s5, %s888
          %s891 = sshll.u32 [#allocation7], 4
          %s892 = int_to_ptr.vmem [resolvable:$true] %s891
          %894 = dma.vmem_to_hbm [thread:$0]  %s892, 128, %s889, [#allocation6]
        $region97: #{tpu_custom_call.1} parent=76 // pred_fallthru
          _
        // Predicated region
        $region98: #{tpu_custom_call.1} parent=76 // pred_check
          %p895 = pneg %p160
        $region99: #{tpu_custom_call.1} parent=76 // pred_check_branch
          %897 = sbr.rel (%p895) target = $region101
        $region100: #{tpu_custom_call.1} parent=76 // pred_region
          %898 = dma.done [#allocation6], 128
        $region101: #{tpu_custom_call.1} parent=76 // pred_fallthru
          _
      $region77: #{tpu_custom_call.1} parent=5 // pred_fallthru
        _
      %p899 = scmp.le.s32.totalorder 2, %s13
      // Predicated region
      $region102: #{tpu_custom_call.1} parent=5 // pred_check
        %p900 = pneg %p899
      $region103: #{tpu_custom_call.1} parent=5 // pred_check_branch
        %902 = sbr.rel (%p900) target = $region105
      $region104: #{tpu_custom_call.1} parent=5 // pred_region
        %s903 = ssub.s32 %s13, 2
      $region105: #{tpu_custom_call.1} parent=5 // pred_fallthru
        _
    $region6: #{tpu_custom_call.1} parent=1 // loop_footer
      %s17 = sadd.s32 1, %s13
    $region7: #{tpu_custom_call.1} parent=1 // loop_footer_branch
      %12 = sbr.rel target = $region3
    $region8: #{tpu_custom_call.1} parent=1 // loop_exit
      _
    %904 = vsyncpa [#allocation5], 1
    %s905 = scalar_lea.sflag [#allocation5], 1
    %906 = vsyncpa %s905, 1
    %907 = vsyncpa [#allocation6], 1
    %s908 = scalar_lea.sflag [#allocation6], 1
    %909 = vsyncpa %s908, 1

</llo_original>
